<compile_context>
chip_gen: v7x
topology: tpu7x:2x2x1
jax: 0.10.0
libtpu: 0.0.40
codegen_flags: <defaults>
</compile_context>

<pallas_src>
import numpy as np
import jax
import jax.numpy as jnp
from jax.experimental import pallas as pl
from jax.experimental.pallas import tpu as pltpu

SMOOTHING = 0.1
CONFIDENCE = 1.0 - SMOOTHING
LANE = 128


def calculate_class_weights(labels):
    """Host-side replica of LabelSmoothingCrossEntropy.calculate_class_weights.

    `labels` is a deterministic synthetic stand-in for iterating the dataset.
    Returns a float32 vector of length 5.
    """
    class_counts = np.zeros(4, dtype=np.int64)
    for label in labels:
        class_counts[label] += 1
    class_counts[1:] = np.maximum(class_counts[1:], 1)
    weights = class_counts[1] / class_counts[1:]
    weights = np.array([1.0, 1.0] + list(weights))
    return jnp.asarray(weights, dtype=jnp.float32)


def _ls_ce_kernel(n_ref, x_ref, tgt_ref, x0_ref, w_ref, out_ref, acc_ref):
    # n_ref:   (1,)        int32 SMEM (scalar prefetch) -- true (unpadded) N
    # x_ref:   (C, W, TN)  logits block: class axis leading, N lane-dense
    # tgt_ref: (W, TN)     int32 targets block
    # x0_ref:  (C, W, 1)   logits at N-index 0 (PyTorch gather quirk)
    # w_ref:   (W, 1)      f32 class weights (applied post-reduction)
    # out_ref: (1, 1)      f32 scalar loss, SMEM
    # acc_ref: (W, TN)     f32 VMEM accumulator, persists across grid steps
    j = pl.program_id(0)
    C, W, TN = x_ref.shape

    @pl.when(j == 0)
    def _init():
        acc_ref[...] = jnp.zeros_like(acc_ref)

    # ---- log-softmax over the C classes, unrolled on (W, TN) lane-dense slabs
    # (VPU maxes/adds + EUP exp/log; no reductions over a padded lane axis).
    xc = [x_ref[c].astype(jnp.float32) for c in range(C)]      # C x (W, TN)
    m = xc[0]
    for c in range(1, C):
        m = jnp.maximum(m, xc[c])
    s = jnp.exp(xc[0] - m)
    xsum = xc[0]
    for c in range(1, C):
        s = s + jnp.exp(xc[c] - m)
        xsum = xsum + xc[c]
    lse = m + jnp.log(s)                                       # (W, TN)
    # smooth_loss = -mean_c(logprobs) = lse - mean_c(x); divide by the TRUE C
    smooth = lse - xsum * (1.0 / C)                            # (W, TN)

    # ---- nll term.  PyTorch gather(dim=-1, index=target.unsqueeze(1)) has
    # index shape (W, 1, N): it reads logprobs[w, 0, target[w, n]] -- ONLY
    # row n=0 of dim 1.  We reproduce that quirk exactly via x0_ref.
    x0c = [x0_ref[c].astype(jnp.float32) for c in range(C)]    # C x (W, 1)
    m0 = x0c[0]
    for c in range(1, C):
        m0 = jnp.maximum(m0, x0c[c])
    s0 = jnp.exp(x0c[0] - m0)
    for c in range(1, C):
        s0 = s0 + jnp.exp(x0c[c] - m0)
    lse0 = m0 + jnp.log(s0)                                    # (W, 1)

    tgt = tgt_ref[...]                                         # (W, TN) int32
    nll = jnp.zeros((W, TN), jnp.float32)
    for c in range(C):                       # unrolled compare/select gather
        nll = nll + jnp.where(tgt == c, lse0 - x0c[c], 0.0)    # -logprob0[c]

    loss = CONFIDENCE * nll + SMOOTHING * smooth               # (W, TN)

    # mask out padded columns (N was rounded up to a multiple of TN)
    col = jax.lax.broadcasted_iota(jnp.int32, (W, TN), 1) + j * TN
    loss = jnp.where(col < n_ref[0], loss, 0.0)

    acc_ref[...] += loss

    @pl.when(j == pl.num_programs(0) - 1)
    def _finalize():
        # class weights are constant over (N, C): apply after the reductions
        row_sums = jnp.sum(acc_ref[...], axis=1, keepdims=True)   # (W, 1)
        total = jnp.sum(row_sums * w_ref[...])
        out_ref[0, 0] = total / (n_ref[0].astype(jnp.float32) * W)


def label_smoothing_ce(x, target, class_weights, *, block_n=512):
    """Pallas forward of LabelSmoothingCrossEntropy.

    x: (W, N, C) logits (any float dtype -- passed in native dtype and upcast
    in-kernel), target: (W, N) int, class_weights: (W,) f32 broadcast over the
    leading axis exactly as PyTorch's weights.view(-1, 1, 1).
    """
    W, N, C = x.shape
    assert class_weights.shape[0] == W, "weights broadcast over leading axis"
    assert block_n % LANE == 0

    # lane-dense layout: tiny class axis leading, large N axis on the lanes.
    x_t = jnp.transpose(x, (2, 0, 1))                # (C, W, N), native dtype
    x0 = jnp.transpose(x[:, 0:1, :], (2, 0, 1))      # (C, W, 1) gather-quirk slice
    tgt = target.astype(jnp.int32)
    wts = class_weights.reshape(W, 1).astype(jnp.float32)

    tn = block_n if N >= block_n else ((N + LANE - 1) // LANE) * LANE
    n_pad = ((N + tn - 1) // tn) * tn
    if n_pad != N:
        x_t = jnp.pad(x_t, ((0, 0), (0, 0), (0, n_pad - N)))
        tgt = jnp.pad(tgt, ((0, 0), (0, n_pad - N)))
    grid = (n_pad // tn,)
    n_valid = jnp.array([N], dtype=jnp.int32)

    # TODO(synk): for v7x 2-TC parallelism this single reduction axis would
    # need a per-core partial-sum split (core_map / 2-D grid) + final combine.
    out = pl.pallas_call(
        _ls_ce_kernel,
        out_shape=jax.ShapeDtypeStruct((1, 1), jnp.float32),
        grid_spec=pltpu.PrefetchScalarGridSpec(
            num_scalar_prefetch=1,
            grid=grid,
            in_specs=[
                pl.BlockSpec((C, W, tn), lambda j, n: (0, 0, j)),
                pl.BlockSpec((W, tn), lambda j, n: (0, j)),
                pl.BlockSpec((C, W, 1), lambda j, n: (0, 0, 0)),
                pl.BlockSpec((W, 1), lambda j, n: (0, 0)),
            ],
            out_specs=pl.BlockSpec(memory_space=pltpu.MemorySpace.SMEM),
            scratch_shapes=[pltpu.VMEM((W, tn), jnp.float32)],
        ),
        compiler_params=pltpu.CompilerParams(
            # the grid axis carries the accumulator -> reduction ("arbitrary")
            dimension_semantics=("arbitrary",),
        ),
    )(n_valid, x_t, tgt, x0, wts)
    return out[0, 0]


def _reference(x, target, class_weights):
    # Pure-JAX reference with identical semantics to the PyTorch forward.
    logprobs = jax.nn.log_softmax(x.astype(jnp.float32), axis=-1)
    wlog = logprobs * class_weights.reshape(-1, 1, 1)
    # PyTorch gather with index (W,1,N) -> reads wlog[w, 0, target[w, n]]
    nll = -jnp.take_along_axis(wlog[:, 0:1, :], target[:, None, :], axis=-1)
    nll = nll[:, 0, :]
    smooth = -jnp.mean(wlog, axis=-1)
    loss = CONFIDENCE * nll + SMOOTHING * smooth
    return jnp.mean(loss)


if __name__ == "__main__":
    # deterministic synthetic "dataset" labels -> class weights of length 5
    synthetic_labels = [0, 0, 1, 1, 1, 2, 2, 3]
    class_weights = calculate_class_weights(synthetic_labels)   # (5,)

    W, N, C = 5, 300, 4   # W must equal len(class_weights) for the broadcast
    key = jax.random.PRNGKey(0)
    kx, kt = jax.random.split(key)
    x = jax.random.normal(kx, (W, N, C), dtype=jnp.float32)
    target = jax.random.randint(kt, (W, N), 0, C, dtype=jnp.int32)

    # block_n=128 gives a 3-step grid at this small N (exercises init /
    # accumulate / finalize and the padded-column mask); default 512 otherwise.
    loss = label_smoothing_ce(x, target, class_weights, block_n=128)
    loss = jax.block_until_ready(loss)

    ref = _reference(x, target, class_weights)
    assert np.allclose(np.asarray(loss), np.asarray(ref), rtol=1e-5, atol=1e-5), (
        loss, ref)

    print("KERNEL_OK")
</pallas_src>

<mosaic_0001>
module attributes {stable_mosaic.version = 11 : i64} {
  func.func @_ls_ce_kernel(%arg0: i32, %arg1: memref<1xi32, #tpu.memory_space<smem>>, %arg2: memref<4x5x128xf32, #tpu.memory_space<vmem>>, %arg3: memref<5x128xi32, #tpu.memory_space<vmem>>, %arg4: memref<4x5x1xf32, #tpu.memory_space<vmem>>, %arg5: memref<5x1xf32, #tpu.memory_space<vmem>>, %arg6: memref<1x1xf32, #tpu.memory_space<smem>>, %arg7: memref<5x128xf32, #tpu.memory_space<vmem>>) attributes {dimension_semantics = [#tpu.dimension_semantics<arbitrary>], iteration_bounds = array<i64: 3>, scalar_prefetch = 1 : i64, scratch_operands = 1 : i64, tpu.core_type = #tpu.core_type<tc>, window_params = [{transform_indices = @transform_0, window_bounds = array<i64: 4, 5, 128>}, {transform_indices = @transform_1, window_bounds = array<i64: 5, 128>}, {pipeline_mode = #tpu.pipeline_mode<synchronous>, transform_indices = @transform_2, window_bounds = array<i64: 4, 5, 1>}, {pipeline_mode = #tpu.pipeline_mode<synchronous>, transform_indices = @transform_3, window_bounds = array<i64: 5, 1>}, {transform_indices = @transform_4, window_bounds = array<i64: 1, 1>}]} {
    %c0_i32 = arith.constant 0 : i32
    %0 = arith.cmpi eq, %arg0, %c0_i32 : i32
    %1 = arith.extui %0 : i1 to i32
    %c0_i32_0 = arith.constant 0 : i32
    %2 = arith.cmpi ne, %1, %c0_i32_0 : i32
    scf.if %2 {
      %cst_39 = arith.constant 0.000000e+00 : f32
      %111 = vector.broadcast %cst_39 : f32 to vector<5x128xf32>
      %c0_40 = arith.constant 0 : index
      %c0_41 = arith.constant 0 : index
      %112 = vector.load %arg7[%c0_40, %c0_41] : memref<5x128xf32, #tpu.memory_space<vmem>>, vector<5x128xf32>
      tpu.vector_store %arg7[%c0_40, %c0_41], %111 {strides = array<i32>} : memref<5x128xf32, #tpu.memory_space<vmem>>, vector<5x128xf32>,
    } else {
    }
    %c0 = arith.constant 0 : index
    %c0_1 = arith.constant 0 : index
    %c0_2 = arith.constant 0 : index
    %3 = vector.load %arg2[%c0, %c0_1, %c0_2] : memref<4x5x128xf32, #tpu.memory_space<vmem>>, vector<1x5x128xf32>
    %4 = vector.shape_cast %3 : vector<1x5x128xf32> to vector<5x128xf32>
    %c1 = arith.constant 1 : index
    %c0_3 = arith.constant 0 : index
    %c0_4 = arith.constant 0 : index
    %5 = vector.load %arg2[%c1, %c0_3, %c0_4] : memref<4x5x128xf32, #tpu.memory_space<vmem>>, vector<1x5x128xf32>
    %6 = vector.shape_cast %5 : vector<1x5x128xf32> to vector<5x128xf32>
    %c2 = arith.constant 2 : index
    %c0_5 = arith.constant 0 : index
    %c0_6 = arith.constant 0 : index
    %7 = vector.load %arg2[%c2, %c0_5, %c0_6] : memref<4x5x128xf32, #tpu.memory_space<vmem>>, vector<1x5x128xf32>
    %8 = vector.shape_cast %7 : vector<1x5x128xf32> to vector<5x128xf32>
    %c3 = arith.constant 3 : index
    %c0_7 = arith.constant 0 : index
    %c0_8 = arith.constant 0 : index
    %9 = vector.load %arg2[%c3, %c0_7, %c0_8] : memref<4x5x128xf32, #tpu.memory_space<vmem>>, vector<1x5x128xf32>
    %10 = vector.shape_cast %9 : vector<1x5x128xf32> to vector<5x128xf32>
    %11 = arith.maximumf %4, %6 : vector<5x128xf32>
    %12 = arith.maximumf %11, %8 : vector<5x128xf32>
    %13 = arith.maximumf %12, %10 : vector<5x128xf32>
    %14 = arith.subf %4, %13 : vector<5x128xf32>
    %15 = math.exp %14 : vector<5x128xf32>
    %16 = arith.subf %6, %13 : vector<5x128xf32>
    %17 = math.exp %16 : vector<5x128xf32>
    %18 = arith.addf %15, %17 : vector<5x128xf32>
    %19 = arith.addf %4, %6 : vector<5x128xf32>
    %20 = arith.subf %8, %13 : vector<5x128xf32>
    %21 = math.exp %20 : vector<5x128xf32>
    %22 = arith.addf %18, %21 : vector<5x128xf32>
    %23 = arith.addf %19, %8 : vector<5x128xf32>
    %24 = arith.subf %10, %13 : vector<5x128xf32>
    %25 = math.exp %24 : vector<5x128xf32>
    %26 = arith.addf %22, %25 : vector<5x128xf32>
    %27 = arith.addf %23, %10 : vector<5x128xf32>
    %28 = math.log %26 : vector<5x128xf32>
    %29 = arith.addf %13, %28 : vector<5x128xf32>
    %cst = arith.constant 2.500000e-01 : f32
    %30 = vector.broadcast %cst : f32 to vector<5x128xf32>
    %31 = arith.mulf %27, %30 : vector<5x128xf32>
    %32 = arith.subf %29, %31 : vector<5x128xf32>
    %c0_9 = arith.constant 0 : index
    %c0_10 = arith.constant 0 : index
    %c0_11 = arith.constant 0 : index
    %33 = vector.load %arg4[%c0_9, %c0_10, %c0_11] : memref<4x5x1xf32, #tpu.memory_space<vmem>>, vector<1x5x1xf32>
    %34 = vector.shape_cast %33 : vector<1x5x1xf32> to vector<5x1xf32>
    %c1_12 = arith.constant 1 : index
    %c0_13 = arith.constant 0 : index
    %c0_14 = arith.constant 0 : index
    %35 = vector.load %arg4[%c1_12, %c0_13, %c0_14] : memref<4x5x1xf32, #tpu.memory_space<vmem>>, vector<1x5x1xf32>
    %36 = vector.shape_cast %35 : vector<1x5x1xf32> to vector<5x1xf32>
    %c2_15 = arith.constant 2 : index
    %c0_16 = arith.constant 0 : index
    %c0_17 = arith.constant 0 : index
    %37 = vector.load %arg4[%c2_15, %c0_16, %c0_17] : memref<4x5x1xf32, #tpu.memory_space<vmem>>, vector<1x5x1xf32>
    %38 = vector.shape_cast %37 : vector<1x5x1xf32> to vector<5x1xf32>
    %c3_18 = arith.constant 3 : index
    %c0_19 = arith.constant 0 : index
    %c0_20 = arith.constant 0 : index
    %39 = vector.load %arg4[%c3_18, %c0_19, %c0_20] : memref<4x5x1xf32, #tpu.memory_space<vmem>>, vector<1x5x1xf32>
    %40 = vector.shape_cast %39 : vector<1x5x1xf32> to vector<5x1xf32>
    %41 = arith.maximumf %34, %36 : vector<5x1xf32>
    %42 = arith.maximumf %41, %38 : vector<5x1xf32>
    %43 = arith.maximumf %42, %40 : vector<5x1xf32>
    %44 = arith.subf %34, %43 : vector<5x1xf32>
    %45 = math.exp %44 : vector<5x1xf32>
    %46 = arith.subf %36, %43 : vector<5x1xf32>
    %47 = math.exp %46 : vector<5x1xf32>
    %48 = arith.addf %45, %47 : vector<5x1xf32>
    %49 = arith.subf %38, %43 : vector<5x1xf32>
    %50 = math.exp %49 : vector<5x1xf32>
    %51 = arith.addf %48, %50 : vector<5x1xf32>
    %52 = arith.subf %40, %43 : vector<5x1xf32>
    %53 = math.exp %52 : vector<5x1xf32>
    %54 = arith.addf %51, %53 : vector<5x1xf32>
    %55 = math.log %54 : vector<5x1xf32>
    %56 = arith.addf %43, %55 : vector<5x1xf32>
    %c0_21 = arith.constant 0 : index
    %c0_22 = arith.constant 0 : index
    %57 = vector.load %arg3[%c0_21, %c0_22] : memref<5x128xi32, #tpu.memory_space<vmem>>, vector<5x128xi32>
    %cst_23 = arith.constant 0.000000e+00 : f32
    %58 = vector.broadcast %cst_23 : f32 to vector<5x128xf32>
    %c0_i32_24 = arith.constant 0 : i32
    %59 = vector.broadcast %c0_i32_24 : i32 to vector<5x128xi32>
    %60 = arith.cmpi eq, %57, %59 : vector<5x128xi32>
    %61 = arith.subf %56, %34 : vector<5x1xf32>
    %cst_25 = arith.constant 0.000000e+00 : f32
    %62 = vector.shape_cast %61 : vector<5x1xf32> to vector<5x1xf32>
    %63 = vector.broadcast %62 : vector<5x1xf32> to vector<5x128xf32>
    %64 = vector.broadcast %cst_25 : f32 to vector<5x128xf32>
    %65 = arith.select %60, %63, %64 : vector<5x128xi1>, vector<5x128xf32>
    %66 = arith.addf %58, %65 : vector<5x128xf32>
    %c1_i32 = arith.constant 1 : i32
    %67 = vector.broadcast %c1_i32 : i32 to vector<5x128xi32>
    %68 = arith.cmpi eq, %57, %67 : vector<5x128xi32>
    %69 = arith.subf %56, %36 : vector<5x1xf32>
    %cst_26 = arith.constant 0.000000e+00 : f32
    %70 = vector.shape_cast %69 : vector<5x1xf32> to vector<5x1xf32>
    %71 = vector.broadcast %70 : vector<5x1xf32> to vector<5x128xf32>
    %72 = vector.broadcast %cst_26 : f32 to vector<5x128xf32>
    %73 = arith.select %68, %71, %72 : vector<5x128xi1>, vector<5x128xf32>
    %74 = arith.addf %66, %73 : vector<5x128xf32>
    %c2_i32 = arith.constant 2 : i32
    %75 = vector.broadcast %c2_i32 : i32 to vector<5x128xi32>
    %76 = arith.cmpi eq, %57, %75 : vector<5x128xi32>
    %77 = arith.subf %56, %38 : vector<5x1xf32>
    %cst_27 = arith.constant 0.000000e+00 : f32
    %78 = vector.shape_cast %77 : vector<5x1xf32> to vector<5x1xf32>
    %79 = vector.broadcast %78 : vector<5x1xf32> to vector<5x128xf32>
    %80 = vector.broadcast %cst_27 : f32 to vector<5x128xf32>
    %81 = arith.select %76, %79, %80 : vector<5x128xi1>, vector<5x128xf32>
    %82 = arith.addf %74, %81 : vector<5x128xf32>
    %c3_i32 = arith.constant 3 : i32
    %83 = vector.broadcast %c3_i32 : i32 to vector<5x128xi32>
    %84 = arith.cmpi eq, %57, %83 : vector<5x128xi32>
    %85 = arith.subf %56, %40 : vector<5x1xf32>
    %cst_28 = arith.constant 0.000000e+00 : f32
    %86 = vector.shape_cast %85 : vector<5x1xf32> to vector<5x1xf32>
    %87 = vector.broadcast %86 : vector<5x1xf32> to vector<5x128xf32>
    %88 = vector.broadcast %cst_28 : f32 to vector<5x128xf32>
    %89 = arith.select %84, %87, %88 : vector<5x128xi1>, vector<5x128xf32>
    %90 = arith.addf %82, %89 : vector<5x128xf32>
    %cst_29 = arith.constant 0.899999976 : f32
    %91 = vector.broadcast %cst_29 : f32 to vector<5x128xf32>
    %92 = arith.mulf %91, %90 : vector<5x128xf32>
    %cst_30 = arith.constant 1.000000e-01 : f32
    %93 = vector.broadcast %cst_30 : f32 to vector<5x128xf32>
    %94 = arith.mulf %93, %32 : vector<5x128xf32>
    %95 = arith.addf %92, %94 : vector<5x128xf32>
    %96 = tpu.iota {dimensions = array<i32: 1>} : vector<5x128xi32>
    %c128_i32 = arith.constant 128 : i32
    %97 = arith.muli %arg0, %c128_i32 : i32
    %98 = vector.broadcast %97 : i32 to vector<5x128xi32>
    %99 = arith.addi %96, %98 : vector<5x128xi32>
    %c0_31 = arith.constant 0 : index
    %100 = memref.load %arg1[%c0_31] : memref<1xi32, #tpu.memory_space<smem>>
    %101 = vector.broadcast %100 : i32 to vector<5x128xi32>
    %102 = arith.cmpi slt, %99, %101 : vector<5x128xi32>
    %cst_32 = arith.constant 0.000000e+00 : f32
    %103 = vector.broadcast %cst_32 : f32 to vector<5x128xf32>
    %104 = arith.select %102, %95, %103 : vector<5x128xi1>, vector<5x128xf32>
    %c0_33 = arith.constant 0 : index
    %c0_34 = arith.constant 0 : index
    %105 = vector.load %arg7[%c0_33, %c0_34] : memref<5x128xf32, #tpu.memory_space<vmem>>, vector<5x128xf32>
    %106 = arith.addf %105, %104 : vector<5x128xf32>
    %c0_35 = arith.constant 0 : index
    %c0_36 = arith.constant 0 : index
    %107 = vector.load %arg7[%c0_35, %c0_36] : memref<5x128xf32, #tpu.memory_space<vmem>>, vector<5x128xf32>
    tpu.vector_store %arg7[%c0_35, %c0_36], %106 {strides = array<i32>} : memref<5x128xf32, #tpu.memory_space<vmem>>, vector<5x128xf32>,
    %c2_i32_37 = arith.constant 2 : i32
    %108 = arith.cmpi eq, %arg0, %c2_i32_37 : i32
    %109 = arith.extui %108 : i1 to i32
    %c0_i32_38 = arith.constant 0 : i32
    %110 = arith.cmpi ne, %109, %c0_i32_38 : i32
    scf.if %110 {
      %c0_39 = arith.constant 0 : index
      %c0_40 = arith.constant 0 : index
      %111 = vector.load %arg7[%c0_39, %c0_40] : memref<5x128xf32, #tpu.memory_space<vmem>>, vector<5x128xf32>
      %cst_41 = arith.constant dense<0.000000e+00> : vector<5xf32>
      %112 = vector.multi_reduction <add>, %111, %cst_41 [1] : vector<5x128xf32> to vector<5xf32>
      %113 = vector.shape_cast %112 : vector<5xf32> to vector<5x1xf32>
      %c0_42 = arith.constant 0 : index
      %c0_43 = arith.constant 0 : index
      %114 = vector.load %arg5[%c0_42, %c0_43] : memref<5x1xf32, #tpu.memory_space<vmem>>, vector<5x1xf32>
      %115 = arith.mulf %113, %114 : vector<5x1xf32>
      %116 = vector.shape_cast %115 : vector<5x1xf32> to vector<1x5x1xf32>
      %cst_44 = arith.constant dense<0.000000e+00> : vector<1xf32>
      %117 = vector.multi_reduction <add>, %116, %cst_44 [1, 2] : vector<1x5x1xf32> to vector<1xf32>
      %118 = vector.shape_cast %117 : vector<1xf32> to vector<1x1x1xf32>
      %119 = vector.extract %118[0, 0, 0] : f32 from vector<1x1x1xf32>
      %c0_45 = arith.constant 0 : index
      %120 = memref.load %arg1[%c0_45] : memref<1xi32, #tpu.memory_space<smem>>
      %121 = arith.sitofp %120 : i32 to f32
      %cst_46 = arith.constant 5.000000e+00 : f32
      %122 = arith.mulf %121, %cst_46 : f32
      %123 = arith.divf %119, %122 : f32
      %c0_47 = arith.constant 0 : index
      %c0_48 = arith.constant 0 : index
      %124 = memref.load %arg6[%c0_47, %c0_48] : memref<1x1xf32, #tpu.memory_space<smem>>
      memref.store %123, %arg6[%c0_47, %c0_48] : memref<1x1xf32, #tpu.memory_space<smem>>
    } else {
    }
    return
  }
  func.func @transform_0(%arg0: i32, %arg1: memref<1xi32, #tpu.memory_space<smem>>) -> (i32, i32, i32) {
    %c0_i32 = arith.constant 0 : i32
    %c0_i32_0 = arith.constant 0 : i32
    %c0_i32_1 = arith.constant 0 : i32
    return %c0_i32, %c0_i32_0, %arg0 : i32, i32, i32
  }
  func.func @transform_1(%arg0: i32, %arg1: memref<1xi32, #tpu.memory_space<smem>>) -> (i32, i32) {
    %c0_i32 = arith.constant 0 : i32
    %c0_i32_0 = arith.constant 0 : i32
    return %c0_i32, %arg0 : i32, i32
  }
  func.func @transform_2(%arg0: i32, %arg1: memref<1xi32, #tpu.memory_space<smem>>) -> (i32, i32, i32) {
    %c0_i32 = arith.constant 0 : i32
    %c0_i32_0 = arith.constant 0 : i32
    %c0_i32_1 = arith.constant 0 : i32
    %c0_i32_2 = arith.constant 0 : i32
    return %c0_i32, %c0_i32_0, %c0_i32_1 : i32, i32, i32
  }
  func.func @transform_3(%arg0: i32, %arg1: memref<1xi32, #tpu.memory_space<smem>>) -> (i32, i32) {
    %c0_i32 = arith.constant 0 : i32
    %c0_i32_0 = arith.constant 0 : i32
    %c0_i32_1 = arith.constant 0 : i32
    return %c0_i32, %c0_i32_0 : i32, i32
  }
  func.func @transform_4(%arg0: i32, %arg1: memref<1xi32, #tpu.memory_space<smem>>) -> (i32, i32) {
    %c0_i32 = arith.constant 0 : i32
    %c0_i32_0 = arith.constant 0 : i32
    %c0_i32_1 = arith.constant 0 : i32
    return %c0_i32, %c0_i32_0 : i32, i32
  }
}

</mosaic_0001>

<llo_original>
// kernel: tpu_custom_call.1
$region0: #{tpu_custom_call.1}
  #allocation0 [shape = 'u32[]', space=smem, size = 0x4, offset = 0x4, fixed_abs, tag = 'smem constant byte address 0x4 - core index']
  #allocation1 [shape = 'u32[144,128]{1,0:T(1,128)}', space=vmem, size = 0x12000, scoped, tag = 'internal scratch']
  #allocation2 [shape = 'f32[5,128]{1,0:T(8,128)}', space=vmem, size = 0x1000, scoped, tag = 'scratch operand']
  #allocation3 [shape = 's32[1]{0}', space=sflag, size = 0x4, scoped, tag = 'scoped memory for tpu_custom_call.1']
  #allocation4 [shape = 's32[1]{0:T(128)S(6)}', space=smem, size = 0x200, scoped, tag = 'prefetched SMEM operand 0']
  %s0 = inlined_call_operand.<no memory space> [shape: s32[1], index: 0, kind: input, shape index: {}]
  %s1 = inlined_call_operand.vmem [shape: f32[4,5,384], index: 1, kind: input, shape index: {}]
  %s2 = inlined_call_operand.vmem [shape: s32[5,384], index: 2, kind: input, shape index: {}]
  %s3 = inlined_call_operand.vmem [shape: f32[4,5,1], index: 3, kind: input, shape index: {}]
  %s4 = inlined_call_operand.vmem [shape: f32[5,1], index: 4, kind: input, shape index: {}]
  %s5 = inlined_call_operand.hbm [shape: f32[1,1], index: 5, kind: output, shape index: {}]
  %s6 = sld [smem:[#allocation0]]
  $region95: #{tpu_custom_call.1} parent=0
    _
  %s8 = ssub.s32 1, %s6
  %s9 = scalar_select 0, %s8, %s6
  %10 = sst [smem:[#allocation4]] %s0
  $region1: #{tpu_custom_call.1} parent=0
    #allocation5 [shape = 'u8[32768]{0}', space=vmem, size = 0x8000, scoped, tag = 'input window, operand 1']
    #allocation6 [shape = 'u8[512]{0}', space=smem, size = 0x200, scoped, tag = 'output window, operand 0, single buffered']
    #allocation7 [shape = 's32[2]{0}', space=sflag, size = 0x8, scoped, tag = 'scoped memory for tpu_custom_call.1']
    %11 = vsyncpa [#allocation7], 0
    loop: start=0, step=1, limit=5
    $region2: #{tpu_custom_call.1} parent=1 // loop_pre_header
      _
    $region3: #{tpu_custom_call.1} parent=1 // loop_header
      %s13 = sphi 0, %s17
      %p14 = scmp.ge.s32.totalorder %s13, 5
      %s23 = sphi 0, %s25
      %s26 = sphi 0, %s23
      %s27 = sphi 0, %s26
      %s43 = sphi 0, %s27
      %s49 = sphi 0, %s51
      %s52 = sphi 0, %s49
      %s53 = sphi 0, %s52
      %s69 = sphi 0, %s53
      %s73 = sphi 0, %s73
      %s75 = sphi 0, %s73
      %s76 = sphi 0, %s75
      %s90 = sphi 0, %s76
      %s94 = sphi 0, %s94
      %s96 = sphi 0, %s94
      %s97 = sphi 0, %s96
      %s111 = sphi 0, %s97
      %s115 = sphi 0, %s115
      %s117 = sphi 0, %s115
      %s118 = sphi 0, %s117
      %s132 = sphi 0, %s118
    $region4: #{tpu_custom_call.1} parent=1 // loop_header_branch
      %16 = sbr.rel (%p14) target = $region8
    $region5: #{tpu_custom_call.1} parent=1 // loop_body
      %s18 = ssub.s32 %s13, 1
      %s19 = ssub.s32 %s13, 2
      %s20 = sadd.s32 %s13, 1
      %s21 = ssub.s32 %s13, %s20
      %p22 = scmp.eq.s32.totalorder %s21, 0
      %s24 = sadd.s32 %s23, 1
      %s25 = scalar_select %p22, %s23, %s24
      %p28 = pneg %p22
      %p29 = scmp.eq.s32.totalorder %s13, 2
      %p30 = por %p28, %p29
      %p31 = scmp.ne.s32.totalorder %s23, %s26
      %p32 = scmp.eq.s32.totalorder %s13, 0
      %p33 = por %p31, %p32
      %p34 = scmp.ne.s32.totalorder %s23, %s26
      %p35 = scmp.eq.s32.totalorder %s18, 2
      %p36 = por %p34, %p35
      %p37 = scmp.ne.s32.totalorder %s26, %s27
      %p38 = scmp.eq.s32.totalorder %s18, 0
      %p39 = por %p37, %p38
      %p40 = scmp.ne.s32.totalorder %s26, %s27
      %p41 = scmp.eq.s32.totalorder %s19, 2
      %p42 = por %p40, %p41
      %p44 = scmp.ne.s32.totalorder %s27, %s43
      %p45 = scmp.eq.s32.totalorder %s19, 0
      %p46 = por %p44, %p45
      %s47 = ssub.s32 %s13, %s20
      %p48 = scmp.eq.s32.totalorder %s47, 0
      %s50 = sadd.s32 %s49, 1
      %s51 = scalar_select %p48, %s49, %s50
      %p54 = pneg %p48
      %p55 = scmp.eq.s32.totalorder %s13, 2
      %p56 = por %p54, %p55
      %p57 = scmp.ne.s32.totalorder %s49, %s52
      %p58 = scmp.eq.s32.totalorder %s13, 0
      %p59 = por %p57, %p58
      %p60 = scmp.ne.s32.totalorder %s49, %s52
      %p61 = scmp.eq.s32.totalorder %s18, 2
      %p62 = por %p60, %p61
      %p63 = scmp.ne.s32.totalorder %s52, %s53
      %p64 = scmp.eq.s32.totalorder %s18, 0
      %p65 = por %p63, %p64
      %p66 = scmp.ne.s32.totalorder %s52, %s53
      %p67 = scmp.eq.s32.totalorder %s19, 2
      %p68 = por %p66, %p67
      %p70 = scmp.ne.s32.totalorder %s53, %s69
      %p71 = scmp.eq.s32.totalorder %s19, 0
      %p72 = por %p70, %p71
      %s74 = sadd.s32 %s73, 1
      %p77 = scmp.eq.s32.totalorder %s13, 2
      %p78 = scmp.ne.s32.totalorder %s73, %s75
      %p79 = scmp.eq.s32.totalorder %s13, 0
      %p80 = por %p78, %p79
      %p81 = scmp.ne.s32.totalorder %s73, %s75
      %p82 = scmp.eq.s32.totalorder %s18, 2
      %p83 = por %p81, %p82
      %p84 = scmp.ne.s32.totalorder %s75, %s76
      %p85 = scmp.eq.s32.totalorder %s18, 0
      %p86 = por %p84, %p85
      %p87 = scmp.ne.s32.totalorder %s75, %s76
      %p88 = scmp.eq.s32.totalorder %s19, 2
      %p89 = por %p87, %p88
      %p91 = scmp.ne.s32.totalorder %s76, %s90
      %p92 = scmp.eq.s32.totalorder %s19, 0
      %p93 = por %p91, %p92
      %s95 = sadd.s32 %s94, 1
      %p98 = scmp.eq.s32.totalorder %s13, 2
      %p99 = scmp.ne.s32.totalorder %s94, %s96
      %p100 = scmp.eq.s32.totalorder %s13, 0
      %p101 = por %p99, %p100
      %p102 = scmp.ne.s32.totalorder %s94, %s96
      %p103 = scmp.eq.s32.totalorder %s18, 2
      %p104 = por %p102, %p103
      %p105 = scmp.ne.s32.totalorder %s96, %s97
      %p106 = scmp.eq.s32.totalorder %s18, 0
      %p107 = por %p105, %p106
      %p108 = scmp.ne.s32.totalorder %s96, %s97
      %p109 = scmp.eq.s32.totalorder %s19, 2
      %p110 = por %p108, %p109
      %p112 = scmp.ne.s32.totalorder %s97, %s111
      %p113 = scmp.eq.s32.totalorder %s19, 0
      %p114 = por %p112, %p113
      %s116 = sadd.s32 %s115, 1
      %p119 = scmp.eq.s32.totalorder %s13, 2
      %p120 = scmp.ne.s32.totalorder %s115, %s117
      %p121 = scmp.eq.s32.totalorder %s13, 0
      %p122 = por %p120, %p121
      %p123 = scmp.ne.s32.totalorder %s115, %s117
      %p124 = scmp.eq.s32.totalorder %s18, 2
      %p125 = por %p123, %p124
      %p126 = scmp.ne.s32.totalorder %s117, %s118
      %p127 = scmp.eq.s32.totalorder %s18, 0
      %p128 = por %p126, %p127
      %p129 = scmp.ne.s32.totalorder %s117, %s118
      %p130 = scmp.eq.s32.totalorder %s19, 2
      %p131 = por %p129, %p130
      %p133 = scmp.ne.s32.totalorder %s118, %s132
      %p134 = scmp.eq.s32.totalorder %s19, 0
      %p135 = por %p133, %p134
      %p136 = scmp.le.s32.totalorder 1, %s13
      %p137 = scmp.lt.s32.totalorder %s13, 4
      %p138 = pnand %p136, %p137
      %p139 = pneg %p138
      // Predicated region
      $region9: #{tpu_custom_call.1} parent=5 // pred_check
        _
      $region10: #{tpu_custom_call.1} parent=5 // pred_check_branch
        %141 = sbr.rel (%p138) target = $region12
      $region11: #{tpu_custom_call.1} parent=5 // pred_region
        %s142 = ssub.s32 %s13, 1
        // Predicated region
        $region13: #{tpu_custom_call.1} parent=11 // pred_check
          %p143 = pneg %p86
        $region14: #{tpu_custom_call.1} parent=11 // pred_check_branch
          %145 = sbr.rel (%p143) target = $region16
        $region15: #{tpu_custom_call.1} parent=11 // pred_region
          _
        $region16: #{tpu_custom_call.1} parent=11 // pred_fallthru
          _
        // Predicated region
        $region17: #{tpu_custom_call.1} parent=11 // pred_check
          %p146 = pneg %p107
        $region18: #{tpu_custom_call.1} parent=11 // pred_check_branch
          %148 = sbr.rel (%p146) target = $region20
        $region19: #{tpu_custom_call.1} parent=11 // pred_region
          _
        $region20: #{tpu_custom_call.1} parent=11 // pred_fallthru
          _
      $region12: #{tpu_custom_call.1} parent=5 // pred_fallthru
        _
      %p149 = scmp.lt.s32.totalorder %s13, 3
      // Predicated region
      $region21: #{tpu_custom_call.1} parent=5 // pred_check
        %p150 = pneg %p149
      $region22: #{tpu_custom_call.1} parent=5 // pred_check_branch
        %152 = sbr.rel (%p150) target = $region24
      $region23: #{tpu_custom_call.1} parent=5 // pred_region
        // Predicated region
        $region25: #{tpu_custom_call.1} parent=23 // pred_check
          %p153 = pneg %p33
        $region26: #{tpu_custom_call.1} parent=23 // pred_check_branch
          %155 = sbr.rel (%p153) target = $region28
        $region27: #{tpu_custom_call.1} parent=23 // pred_region
          %s156 = sand.u32 %s23, 1
          %s157 = sand.u32 %s23, 1
          %s158 = smul.addr %s157, 32
          %s159 = scalar_lea.vmem [#allocation5], %s158
          %s160 = smul.addr %s13, 8
          %s161 = scalar_lea.vmem %s1, %s160
          // Predicated region
          $region29: #{tpu_custom_call.1} parent=27 // pred_check
            _
          $region30: #{tpu_custom_call.1} parent=27 // pred_check_branch
            %163 = sbr.rel (0) target = $region32
          $region31: #{tpu_custom_call.1} parent=27 // pred_region
            // Predicated region
            $region33: #{tpu_custom_call.1} parent=31 // pred_check
              _
            $region34: #{tpu_custom_call.1} parent=31 // pred_check_branch
              %165 = sbr.rel (0) target = $region36
            $region35: #{tpu_custom_call.1} parent=31 // pred_region
              // Predicated region
              $region48: #{tpu_custom_call.1} parent=35 // pred_check
                _
              $region49: #{tpu_custom_call.1} parent=35 // pred_check_branch
                %186 = sbr.rel (0) target = $region51
              $region50: #{tpu_custom_call.1} parent=35 // pred_region
                loop: start=0, step=1, limit=1
                $region52: #{tpu_custom_call.1} parent=50 // loop_pre_header
                  _
                $region53: #{tpu_custom_call.1} parent=50 // loop_header
                  %s188 = sphi 0, %s192
                  %p189 = scmp.ge.s32.totalorder %s188, 1
                  %s193 = sphi %s161, %s161
                  %s194 = sphi %s159, %s159
                $region54: #{tpu_custom_call.1} parent=50 // loop_header_branch
                  %191 = sbr.rel (%p189) target = $region58
                $region55: #{tpu_custom_call.1} parent=50 // loop_body
                  %v195 = vld [vmem:[%s193] sm:$0xff]
                  %196 = vst [vmem:[%s194] sm:$0xff] %v195
                  %v197 = vld [vmem:[%s193 + $0x18] sm:$0xff]
                  %198 = vst [vmem:[%s194 + $0x8] sm:$0xff] %v197
                  %v199 = vld [vmem:[%s193 + $0x30] sm:$0xff]
                  %200 = vst [vmem:[%s194 + $0x10] sm:$0xff] %v199
                  %v201 = vld [vmem:[%s193 + $0x48] sm:$0xff]
                  %202 = vst [vmem:[%s194 + $0x18] sm:$0xff] %v201
                $region56: #{tpu_custom_call.1} parent=50 // loop_footer
                  %s192 = sadd.s32 1, %s188
                $region57: #{tpu_custom_call.1} parent=50 // loop_footer_branch
                  %187 = sbr.rel target = $region53
                $region58: #{tpu_custom_call.1} parent=50 // loop_exit
                  _
              $region51: #{tpu_custom_call.1} parent=35 // pred_fallthru
                _
              // Predicated region
              $region59: #{tpu_custom_call.1} parent=35 // pred_check
                _
              $region60: #{tpu_custom_call.1} parent=35 // pred_check_branch
                %204 = sbr.rel target = $region62
              $region61: #{tpu_custom_call.1} parent=35 // pred_region
                _
              $region62: #{tpu_custom_call.1} parent=35 // pred_fallthru
                _
            $region36: #{tpu_custom_call.1} parent=31 // pred_fallthru
              _
            // Predicated region
            $region37: #{tpu_custom_call.1} parent=31 // pred_check
              _
            $region38: #{tpu_custom_call.1} parent=31 // pred_check_branch
              %167 = sbr.rel target = $region40
            $region39: #{tpu_custom_call.1} parent=31 // pred_region
              loop: start=0, step=1, limit=1
              $region41: #{tpu_custom_call.1} parent=39 // loop_pre_header
                _
              $region42: #{tpu_custom_call.1} parent=39 // loop_header
                %s170 = sphi 0, %s174
                %p171 = scmp.ge.s32.totalorder %s170, 1
                %s175 = sphi %s161, %s161
                %s176 = sphi %s159, %s159
              $region43: #{tpu_custom_call.1} parent=39 // loop_header_branch
                %173 = sbr.rel (%p171) target = $region47
              $region44: #{tpu_custom_call.1} parent=39 // loop_body
                %v177 = vld [vmem:[%s175] sm:$0xff]
                %178 = vst [vmem:[%s176] sm:$0xff] %v177
                %v179 = vld [vmem:[%s175 + $0x18] sm:$0xff]
                %180 = vst [vmem:[%s176 + $0x8] sm:$0xff] %v179
                %v181 = vld [vmem:[%s175 + $0x30] sm:$0xff]
                %182 = vst [vmem:[%s176 + $0x10] sm:$0xff] %v181
                %v183 = vld [vmem:[%s175 + $0x48] sm:$0xff]
                %184 = vst [vmem:[%s176 + $0x18] sm:$0xff] %v183
              $region45: #{tpu_custom_call.1} parent=39 // loop_footer
                %s174 = sadd.s32 1, %s170
              $region46: #{tpu_custom_call.1} parent=39 // loop_footer_branch
                %169 = sbr.rel target = $region42
              $region47: #{tpu_custom_call.1} parent=39 // loop_exit
                _
            $region40: #{tpu_custom_call.1} parent=31 // pred_fallthru
              _
          $region32: #{tpu_custom_call.1} parent=27 // pred_fallthru
            _
          %205 = vnop
        $region28: #{tpu_custom_call.1} parent=23 // pred_fallthru
          _
        // Predicated region
        $region63: #{tpu_custom_call.1} parent=23 // pred_check
          %p206 = pneg %p59
        $region64: #{tpu_custom_call.1} parent=23 // pred_check_branch
          %208 = sbr.rel (%p206) target = $region66
        $region65: #{tpu_custom_call.1} parent=23 // pred_region
          %p209 = scmp.lt.s32.totalorder %s13, 2
          %s210 = scalar_select %p209, %s13, 2
          %s211 = smul.addr %s210, 8
          %s212 = scalar_lea.vmem %s2, %s211
        $region66: #{tpu_custom_call.1} parent=23 // pred_fallthru
          _
      $region24: #{tpu_custom_call.1} parent=5 // pred_fallthru
        _
      %p213 = scmp.le.s32.totalorder 1, %s13
      %p214 = scmp.lt.s32.totalorder %s13, 4
      %p215 = pnand %p213, %p214
      %p216 = pneg %p215
      // Predicated region
      $region67: #{tpu_custom_call.1} parent=5 // pred_check
        _
      $region68: #{tpu_custom_call.1} parent=5 // pred_check_branch
        %218 = sbr.rel (%p215) target = $region70
      $region69: #{tpu_custom_call.1} parent=5 // pred_region
        %s219 = ssub.s32 %s13, 1
        %s220 = sand.u32 %s26, 1
        %s221 = sand.u32 %s26, 1
        %s222 = smul.addr %s221, 32
        %s223 = scalar_lea.vmem [#allocation5], %s222
        // Predicated region
        $region71: #{tpu_custom_call.1} parent=69 // pred_check
          %p224 = pneg %p39
        $region72: #{tpu_custom_call.1} parent=69 // pred_check_branch
          %226 = sbr.rel (%p224) target = $region74
        $region73: #{tpu_custom_call.1} parent=69 // pred_region
          _
        $region74: #{tpu_custom_call.1} parent=69 // pred_fallthru
          _
        %s227 = sand.u32 %s26, 1
        %s228 = sand.u32 %s26, 1
        %s229 = smul.addr %s228, 32
        %s230 = scalar_lea.vmem [#allocation5], %s229
        %p231 = pneg %p39
        %p232 = pneg %p36
        %p233 = scmp.lt.s32.totalorder %s18, 2
        %s234 = scalar_select %p233, %s18, 2
        %s235 = smul.addr %s234, 8
        %s236 = scalar_lea.vmem %s2, %s235
        %p237 = pneg %p65
        %p238 = pneg %p62
        %p239 = pneg %p86
        %p240 = pneg %p83
        %p241 = pneg %p107
        %p242 = pneg %p104
        %p243 = pneg %p128
        %p244 = pneg %p125
        %p245 = scmp.lt.s32.totalorder %s18, 2
        %s246 = scalar_select %p245, %s18, 2
        %s247 = smul.addr %s246, 8
        %s248 = scalar_lea.vmem %s2, %s247
        %p249 = scmp.eq.s32.totalorder %s18, 0
        // Predicated region
        $region75: #{tpu_custom_call.1} parent=69 // pred_check
          %p250 = pneg %p249
        $region76: #{tpu_custom_call.1} parent=69 // pred_check_branch
          %252 = sbr.rel (%p250) target = $region78
        $region77: #{tpu_custom_call.1} parent=69 // pred_region
          %253 = vst [vmem:[#allocation2] sm:$0x1f] 0.0
        $region78: #{tpu_custom_call.1} parent=69 // pred_fallthru
          _
        %v254 = vld [vmem:[%s223] sm:$0x1f]
        %s255 = scalar_lea.vmem %s223, 8 [#allocation5]
        %v256 = vld [vmem:[%s255] sm:$0x1f]
        %s257 = scalar_lea.vmem %s223, 16 [#allocation5]
        %v258 = vld [vmem:[%s257] sm:$0x1f]
        %s259 = scalar_lea.vmem %s223, 24 [#allocation5]
        %v260 = vld [vmem:[%s259] sm:$0x1f]
        %v261 = vmax.f32 %v254, %v256
        %v262 = vmax.f32 %v261, %v258
        %v263 = vmax.f32 %v262, %v260
        %v264 = vsub.f32 %v254, %v263
        %v265 = vmul.f32 %v264, 1.442695
        %v266 = vpow.pop %v265
        %v267 = vsub.f32 %v256, %v263
        %v268 = vmul.f32 %v267, 1.442695
        %v269 = vpow.pop %v268
        %v270 = vadd.f32 %v266, %v269
        %v271 = vadd.f32 %v254, %v256
        %v272 = vsub.f32 %v258, %v263
        %v273 = vmul.f32 %v272, 1.442695
        %v274 = vpow.pop %v273
        %v275 = vadd.f32 %v270, %v274
        %v276 = vadd.f32 %v271, %v258
        %v277 = vsub.f32 %v260, %v263
        %v278 = vmul.f32 %v277, 1.442695
        %v279 = vpow.pop %v278
        %v280 = vadd.f32 %v275, %v279
        %v281 = vadd.f32 %v276, %v260
        %v282 = vlog2.pop %v280
        %v283 = vmul.f32 %v282, 0.6931472
        %v284 = vadd.f32 %v263, %v283
        %v285 = vmul.f32 %v281, 0.25
        %v286 = vsub.f32 %v284, %v285
        %v287 = vld [vmem:[%s3] sm:$0x1f]
        %s288 = scalar_lea.vmem %s3, 8
        %v289 = vld [vmem:[%s288] sm:$0x1f]
        %s290 = scalar_lea.vmem %s3, 16
        %v291 = vld [vmem:[%s290] sm:$0x1f]
        %s292 = scalar_lea.vmem %s3, 24
        %v293 = vld [vmem:[%s292] sm:$0x1f]
        %v294 = vmax.f32 %v287, %v289
        %v295 = vmax.f32 %v294, %v291
        %v296 = vmax.f32 %v295, %v293
        %v297 = vsub.f32 %v287, %v296
        %v298 = vmul.f32 %v297, 1.442695
        %v299 = vpow.pop %v298
        %v300 = vsub.f32 %v289, %v296
        %v301 = vmul.f32 %v300, 1.442695
        %v302 = vpow.pop %v301
        %v303 = vadd.f32 %v299, %v302
        %v304 = vsub.f32 %v291, %v296
        %v305 = vmul.f32 %v304, 1.442695
        %v306 = vpow.pop %v305
        %v307 = vadd.f32 %v303, %v306
        %v308 = vsub.f32 %v293, %v296
        %v309 = vmul.f32 %v308, 1.442695
        %v310 = vpow.pop %v309
        %v311 = vadd.f32 %v307, %v310
        %v312 = vlog2.pop %v311
        %v313 = vmul.f32 %v312, 0.6931472
        %v314 = vadd.f32 %v296, %v313
        %v315 = vld [vmem:[%s248] sm:$0x1f]
        %vm316 = vcmp.eq.s32.totalorder %v315, 0
        %v317 = vsub.f32 %v314, %v287
        %319 = vset.pattern.permute.xlu0 0
        %320 = vperm.xlu0 %319, %v317
        %v321 = vpop.permute.xlu0 %320
        %v323 = vsel %vm316, %v321, 0.0
        %v324 = vadd.f32 %v323, 0.0
        %vm325 = vcmp.eq.s32.totalorder %v315, 1
        %v326 = vsub.f32 %v314, %v289
        %328 = vset.pattern.permute.xlu0 0
        %329 = vperm.xlu0 %328, %v326
        %v330 = vpop.permute.xlu0 %329
        %v332 = vsel %vm325, %v330, 0.0
        %v333 = vadd.f32 %v324, %v332
        %vm334 = vcmp.eq.s32.totalorder %v315, 2
        %v335 = vsub.f32 %v314, %v291
        %337 = vset.pattern.permute.xlu0 0
        %338 = vperm.xlu0 %337, %v335
        %v339 = vpop.permute.xlu0 %338
        %v341 = vsel %vm334, %v339, 0.0
        %v342 = vadd.f32 %v333, %v341
        %vm343 = vcmp.eq.s32.totalorder %v315, 3
        %v344 = vsub.f32 %v314, %v293
        %346 = vset.pattern.permute.xlu0 0
        %347 = vperm.xlu0 %346, %v344
        %v348 = vpop.permute.xlu0 %347
        %v350 = vsel %vm343, %v348, 0.0
        %v351 = vadd.f32 %v342, %v350
        %v352 = vmul.f32 %v351, 0.9
        %v353 = vmul.f32 %v286, 0.1
        %v354 = vadd.f32 %v352, %v353
        %v355 = vlaneseq
        %v356 = vand.u32 %v355, 127
        %s357 = smul.u32 %s18, 128
        %v358 = vstv %s357
        %v359 = vadd.s32 %v356, %v358
        %s360 = sld [smem:[#allocation4]]
        %v361 = vstv %s360
        %vm362 = vcmp.lt.s32.totalorder %v359, %v361
        %v363 = vsel %vm362, %v354, 0.0
        %v364 = vld [vmem:[#allocation2] sm:$0x1f]
        %v365 = vadd.f32 %v364, %v363
        %366 = vst [vmem:[#allocation2] sm:$0x1f] %v365
        %p367 = scmp.eq.s32.totalorder %s18, 2
        // Predicated region
        $region79: #{tpu_custom_call.1} parent=69 // pred_check
          %p368 = pneg %p367
        $region80: #{tpu_custom_call.1} parent=69 // pred_check_branch
          %370 = sbr.rel (%p368) target = $region82
        $region81: #{tpu_custom_call.1} parent=69 // pred_region
          %v371 = vld [vmem:[#allocation2] sm:$0x1f]
          %vm372 = vcmask 1044480
          %v373 = vsel %vm372, %v371, 0.0
          %374 = vadd.xlane.f32.xlu0 %v373
          %v375 = vpop.xlane.xlu0 %374
          %v376 = vld [vmem:[%s4] sm:$0x1f]
          %v377 = vmul.f32 %v375, %v376
          %vm378 = vcmask 4096
          %v379 = vsel %vm378, %v377, 0.0
          %380 = vadd.xlane.f32.xlu0 %v379
          %v381 = vpop.xlane.xlu0 %380
          %v382 = vrot.slane %v381, 4
          %v383 = vadd.f32 %v381, %v382
          %v384 = vrot.slane %v383, 2
          %v385 = vadd.f32 %v383, %v384
          %v386 = vrot.slane %v385, 1
          %v387 = vadd.f32 %v385, %v386
          %s388 = vtos %v387
          %s389 = sld [smem:[#allocation4]]
          %s390 = scvt.s32.f32 %s389
          %s391 = smul.f32 %s390, 5.0
          %v392 = vstv %s391
          %v393 = vrcp.pop %v392
          %s394 = vtos %v393
          %s395 = smul.f32 %s388, %s394
          %s396 = scalar_lea.smem [#allocation6], 0
          %397 = sst [smem:[%s396]] %s395
        $region82: #{tpu_custom_call.1} parent=69 // pred_fallthru
          _
        // Predicated region
        $region83: #{tpu_custom_call.1} parent=69 // pred_check
          %p398 = pneg %p125
        $region84: #{tpu_custom_call.1} parent=69 // pred_check_branch
          %400 = sbr.rel (%p398) target = $region86
        $region85: #{tpu_custom_call.1} parent=69 // pred_region
          %s402 = ssub.s32 16, 16
          %403 = vsyncadd [#allocation7], %s402
          %406 = dma.smem_to_hbm [#allocation6], 16, %s5, [#allocation7]
        $region86: #{tpu_custom_call.1} parent=69 // pred_fallthru
          _
        // Predicated region
        $region87: #{tpu_custom_call.1} parent=69 // pred_check
          %p407 = pneg %p125
        $region88: #{tpu_custom_call.1} parent=69 // pred_check_branch
          %409 = sbr.rel (%p407) target = $region90
        $region89: #{tpu_custom_call.1} parent=69 // pred_region
          %410 = dma.done [#allocation7], 16
        $region90: #{tpu_custom_call.1} parent=69 // pred_fallthru
          _
        %411 = sfence
      $region70: #{tpu_custom_call.1} parent=5 // pred_fallthru
        _
      %p412 = scmp.le.s32.totalorder 2, %s13
      // Predicated region
      $region91: #{tpu_custom_call.1} parent=5 // pred_check
        %p413 = pneg %p412
      $region92: #{tpu_custom_call.1} parent=5 // pred_check_branch
        %415 = sbr.rel (%p413) target = $region94
      $region93: #{tpu_custom_call.1} parent=5 // pred_region
        %s416 = ssub.s32 %s13, 2
      $region94: #{tpu_custom_call.1} parent=5 // pred_fallthru
        _
    $region6: #{tpu_custom_call.1} parent=1 // loop_footer
      %s17 = sadd.s32 1, %s13
    $region7: #{tpu_custom_call.1} parent=1 // loop_footer_branch
      %12 = sbr.rel target = $region3
    $region8: #{tpu_custom_call.1} parent=1 // loop_exit
      _
    %417 = vsyncpa [#allocation7], 1
    %s418 = scalar_lea.sflag [#allocation7], 1
    %419 = vsyncpa %s418, 1

</llo_original>
